<compile_context>
chip_gen: v7x
topology: tpu7x:2x2x1
jax: 0.10.0
libtpu: 0.0.40
codegen_flags: <defaults>
</compile_context>

<pallas_src>
import functools
import math

import jax
import jax.numpy as jnp
from jax import lax
from jax.experimental import pallas as pl
from jax.experimental.pallas import tpu as pltpu

_INV_SQRT2 = 1.0 / math.sqrt(2.0)


def _round_up(a: int, b: int) -> int:
    return ((a + b - 1) // b) * b


def _cdiv(a: int, b: int) -> int:
    return (a + b - 1) // b


def _default_vmem_limit_bytes() -> int:
    try:
        cap = pltpu.get_tpu_info().vmem_capacity_bytes
    except Exception:
        cap = 64 << 20  # conservative fallback (v7x per-core VMEM)
    # ~96 MiB on v5e/v6e (128 MiB physical), ~48 MiB on v7x (64 MiB physical).
    return int(min(100 << 20, cap * 3 // 4))


def _gelu_f32(h, approximate: bool):
    if approximate:
        # tanh-approx GELU: transcendental goes to the EUP (separate VLIW slot).
        return jax.nn.gelu(h, approximate=True)
    # Exact erf GELU (matches torch.nn.GELU() default, approximate='none').
    return 0.5 * h * (1.0 + lax.erf(h * _INV_SQRT2))


# ----------------------------------------------------------------------------
# Kernels
# ----------------------------------------------------------------------------
def _ffn_kernel_resident(x_ref, w1_ref, b1_ref, w2_ref, b2_ref, o_ref, *,
                         approximate):
    # Weights fully resident in VMEM; grid = (num_M_tiles,). No accumulator.
    h = jnp.dot(x_ref[...], w1_ref[...], preferred_element_type=jnp.float32)
    h = h + b1_ref[...].astype(jnp.float32)
    h = _gelu_f32(h, approximate)
    y = jnp.dot(h.astype(w2_ref.dtype), w2_ref[...],
                preferred_element_type=jnp.float32)
    o_ref[...] = (y + b2_ref[...].astype(jnp.float32)).astype(o_ref.dtype)


def _ffn_kernel_tiled(x_ref, w1_ref, b1_ref, w2_ref, b2_ref, o_ref, acc_ref, *,
                      approximate):
    # d_ff streamed in chunks; grid = (num_M_tiles, num_dff_chunks).
    k = pl.program_id(1)

    @pl.when(k == 0)
    def _init():
        acc_ref[...] = jnp.zeros_like(acc_ref)

    h = jnp.dot(x_ref[...], w1_ref[...], preferred_element_type=jnp.float32)
    h = h + b1_ref[...].astype(jnp.float32)
    h = _gelu_f32(h, approximate)
    acc_ref[...] += jnp.dot(h.astype(w2_ref.dtype), w2_ref[...],
                            preferred_element_type=jnp.float32)

    @pl.when(k == pl.num_programs(1) - 1)
    def _finalize():
        o_ref[...] = (acc_ref[...]
                      + b2_ref[...].astype(jnp.float32)).astype(o_ref.dtype)


# ----------------------------------------------------------------------------
# Tile planner
# ----------------------------------------------------------------------------
def _plan(M, d_model, d_ff, w_it, x_it, o_it, budget, tm_req, tf_req):
    """Returns (mode, tm, tf, weight_buffer_count)."""
    M8 = _round_up(max(M, 1), 8)
    tm_cap_user = _round_up(tm_req, 8) if tm_req is not None else 1024

    def clamp_tm(t):
        t = min(t, tm_cap_user, M8)
        return max(8, (t // 8) * 8)

    bias_bytes = 2 * d_ff * w_it + 2 * d_model * w_it

    # ---- resident-weights plan: collapse the k axis when W1+W2 fit VMEM.
    resident_allowed = (tf_req is None) or (tf_req >= d_ff)
    if resident_allowed:
        w_resident = 2 * d_model * d_ff * w_it + bias_bytes   # single-buffered
        per_row = d_model * (2 * x_it + 2 * o_it)              # x, out double-buffered
        room = budget - w_resident
        if room > 0 and room // per_row >= 8:
            tm = clamp_tm(room // per_row)
            # Megacore-friendly split: give a second TensorCore (v7x) work when
            # there would be a single M tile. Weights are resident, so the
            # extra tile costs no HBM traffic on single-core chips.
            if tm_req is None and M8 <= tm and M8 >= 16:
                tm = _round_up(_cdiv(M8, 2), 8)
            return ("resident", tm, d_ff, 1)

    # ---- tiled d_ff plan: pick (tf, nbuf) maximizing tm (minimizes weight
    #      re-streaming per M tile), then tf, then buffer depth.
    per_row = d_model * (2 * x_it + 2 * o_it + 4)   # + f32 accumulator
    if tf_req is not None:
        tf_cands = [max(128, (min(tf_req, d_ff) // 128) * 128)]
    else:
        tf_cands = [c for c in (512, 256, 128) if c <= d_ff] or [128]

    best = None
    for tf in tf_cands:
        for nbuf in (3, 2):
            fixed = (2 * d_model * tf * w_it * nbuf   # W1 + W2 blocks, nbuf-deep
                     + 2 * tf * w_it                   # b1 block (double-buffered)
                     + d_model * w_it)                 # b2 (single-buffered)
            room = budget - fixed
            if room <= 0:
                continue
            tm_cap = room // per_row
            if tm_cap < 8:
                continue
            tm = clamp_tm(tm_cap)
            key = (tm, tf, nbuf)
            if best is None or key > best[0]:
                best = (key, (tm, tf, nbuf))
    if best is not None:
        tm, tf, nbuf = best[1]
        return ("tiled", tm, tf, nbuf)

    # Last resort (pathologically small budget): minimal tiles.
    tf_fb = max(128, (min(tf_req or 128, d_ff) // 128) * 128)
    return ("tiled", clamp_tm(8 if tm_req is None else tm_req), tf_fb, 2)


# ----------------------------------------------------------------------------
# Public wrapper
# ----------------------------------------------------------------------------
def feed_forward_network(x, w1, b1, w2, b2, *, tm=None, tf=None,
                         approximate_gelu=False, compute_dtype=None,
                         vmem_limit_bytes=None):
    """x: [..., d_model]; w1: [d_model, d_ff]; b1: [d_ff];
    w2: [d_ff, d_model]; b2: [d_model]."""
    orig_shape = x.shape
    d_model = orig_shape[-1]
    d_ff = w1.shape[1]
    out_dtype = x.dtype

    x2d = x.reshape(-1, d_model)
    M = x2d.shape[0]

    # Optional MXU-dtype cast (e.g. jnp.bfloat16 on v5e for f32 params);
    # accumulation stays f32, bias/GELU stay f32, output dtype unchanged.
    if compute_dtype is not None:
        x2d = x2d.astype(compute_dtype)
        w1 = w1.astype(compute_dtype)
        w2 = w2.astype(compute_dtype)

    if vmem_limit_bytes is None:
        vmem_limit_bytes = _default_vmem_limit_bytes()
    plan_budget = int(vmem_limit_bytes) * 9 // 10   # headroom for Mosaic scratch

    mode, tm_eff, tf_eff, nbuf_w = _plan(
        M, d_model, d_ff,
        w_it=w1.dtype.itemsize, x_it=x2d.dtype.itemsize,
        o_it=jnp.dtype(out_dtype).itemsize,
        budget=plan_budget, tm_req=tm, tf_req=tf)

    # ---- M tiling: pad rows with zeros, slice at the end.
    M_pad = _round_up(M, tm_eff)
    if M_pad != M:
        x2d = jnp.pad(x2d, ((0, M_pad - M), (0, 0)))
    nm = M_pad // tm_eff

    b2_2d = b2.reshape(1, d_model)

    if mode == "resident":
        # Weights fully resident (constant block index, single-buffered).
        b1_2d = b1.reshape(1, d_ff)
        kernel = functools.partial(_ffn_kernel_resident,
                                   approximate=approximate_gelu)
        grid = (nm,)
        in_specs = [
            pl.BlockSpec((tm_eff, d_model), lambda i: (i, 0)),
            pl.BlockSpec((d_model, d_ff), lambda i: (0, 0),
                         pipeline_mode=pl.Buffered(1)),
            pl.BlockSpec((1, d_ff), lambda i: (0, 0),
                         pipeline_mode=pl.Buffered(1)),
            pl.BlockSpec((d_ff, d_model), lambda i: (0, 0),
                         pipeline_mode=pl.Buffered(1)),
            pl.BlockSpec((1, d_model), lambda i: (0, 0),
                         pipeline_mode=pl.Buffered(1)),
        ]
        out_specs = pl.BlockSpec((tm_eff, d_model), lambda i: (i, 0))
        scratch_shapes = []
        dim_sem = ("parallel",)
        weight_stream_factor = 1
    else:
        # d_ff streamed in lane-aligned chunks; zero-padding d_ff is exact
        # (GELU(0)=0 and padded W2 rows are zero).
        d_ff_pad = _round_up(d_ff, tf_eff)
        if d_ff_pad != d_ff:
            w1 = jnp.pad(w1, ((0, 0), (0, d_ff_pad - d_ff)))
            b1 = jnp.pad(b1, (0, d_ff_pad - d_ff))
            w2 = jnp.pad(w2, ((0, d_ff_pad - d_ff), (0, 0)))
        b1_2d = b1.reshape(1, d_ff_pad)
        nk = d_ff_pad // tf_eff

        def serp(i, k):
            # Serpentine k: reverse direction on odd M tiles so the weight
            # block at each M-tile boundary is reused, not re-fetched.
            return k + (i % 2) * (nk - 1 - 2 * k)

        kernel = functools.partial(_ffn_kernel_tiled,
                                   approximate=approximate_gelu)
        grid = (nm, nk)
        in_specs = [
            pl.BlockSpec((tm_eff, d_model), lambda i, k: (i, 0)),
            pl.BlockSpec((d_model, tf_eff), lambda i, k: (0, serp(i, k)),
                         pipeline_mode=pl.Buffered(nbuf_w)),
            pl.BlockSpec((1, tf_eff), lambda i, k: (0, serp(i, k))),
            pl.BlockSpec((tf_eff, d_model), lambda i, k: (serp(i, k), 0),
                         pipeline_mode=pl.Buffered(nbuf_w)),
            pl.BlockSpec((1, d_model), lambda i, k: (0, 0),
                         pipeline_mode=pl.Buffered(1)),
        ]
        out_specs = pl.BlockSpec((tm_eff, d_model), lambda i, k: (i, 0))
        scratch_shapes = [pltpu.VMEM((tm_eff, d_model), jnp.float32)]
        dim_sem = ("parallel", "arbitrary")
        weight_stream_factor = nm   # W1/W2 are re-streamed once per M tile

    # Advisory cost hint reflecting real traffic (weights x stream factor).
    w_bytes = (d_model * d_ff * w1.dtype.itemsize
               + d_ff * d_model * w2.dtype.itemsize) * weight_stream_factor
    bytes_accessed = (
        M * d_model * x2d.dtype.itemsize
        + M * d_model * jnp.dtype(out_dtype).itemsize
        + w_bytes
        + d_ff * b1.dtype.itemsize + d_model * b2.dtype.itemsize)
    cost = pl.CostEstimate(flops=4 * M * d_model * d_ff,
                           transcendentals=M * d_ff,
                           bytes_accessed=int(bytes_accessed))

    out = pl.pallas_call(
        kernel,
        out_shape=jax.ShapeDtypeStruct((M_pad, d_model), out_dtype),
        grid_spec=pltpu.PrefetchScalarGridSpec(
            num_scalar_prefetch=0,
            grid=grid,
            in_specs=in_specs,
            out_specs=out_specs,
            scratch_shapes=scratch_shapes,
        ),
        compiler_params=pltpu.CompilerParams(
            dimension_semantics=dim_sem,
            vmem_limit_bytes=int(vmem_limit_bytes),
        ),
        cost_estimate=cost,
    )(x2d, w1, b1_2d, w2, b2_2d)

    if M_pad != M:
        out = out[:M]
    return out.reshape(orig_shape[:-1] + (d_model,))


def init_params(key, d_model, d_ff, dtype=jnp.float32):
    # Deterministic init mirroring nn.Linear's uniform(-1/sqrt(fan_in), +).
    k1, k2, k3, k4 = jax.random.split(key, 4)
    bound1 = 1.0 / math.sqrt(d_model)
    bound2 = 1.0 / math.sqrt(d_ff)
    # Stored pre-transposed as (in_features, out_features).
    w1 = jax.random.uniform(k1, (d_model, d_ff), dtype, minval=-bound1, maxval=bound1)
    b1 = jax.random.uniform(k2, (d_ff,), dtype, minval=-bound1, maxval=bound1)
    w2 = jax.random.uniform(k3, (d_ff, d_model), dtype, minval=-bound2, maxval=bound2)
    b2 = jax.random.uniform(k4, (d_model,), dtype, minval=-bound2, maxval=bound2)
    return w1, b1, w2, b2


if __name__ == "__main__":
    key = jax.random.PRNGKey(0)
    kx, kp = jax.random.split(key)

    # Small shapes; seq=9 gives M=18 (exercises M padding / megacore M split).
    batch, seq, d_model, d_ff = 2, 9, 32, 256
    x = jax.random.normal(kx, (batch, seq, d_model), dtype=jnp.float32)
    w1, b1, w2, b2 = init_params(kp, d_model, d_ff)

    # Pure-JAX reference of the module semantics (Linear -> exact GELU -> Linear).
    h_ref = x @ w1 + b1
    h_ref = 0.5 * h_ref * (1.0 + lax.erf(h_ref / jnp.sqrt(2.0)))
    y_ref = h_ref @ w2 + b2

    # 1) Auto plan: weights fit VMEM -> resident-weights kernel, M split into 2 tiles.
    y0 = jax.block_until_ready(feed_forward_network(x, w1, b1, w2, b2))
    # 2) Forced d_ff-tiled path: exercises the f32 accumulator, pl.when
    #    init/finalize, serpentine weight index maps, and Buffered(3) streaming.
    y1 = jax.block_until_ready(feed_forward_network(x, w1, b1, w2, b2, tm=8, tf=128))

    assert y0.shape == (batch, seq, d_model)
    assert y1.shape == (batch, seq, d_model)
    for y in (y0, y1):
        err = jnp.max(jnp.abs(y - y_ref))
        assert jnp.allclose(y, y_ref, atol=2e-5, rtol=2e-5), f"max abs err = {err}"

    print("KERNEL_OK")
</pallas_src>

<mosaic_0001>
module attributes {stable_mosaic.version = 11 : i64} {
  func.func @_ffn_kernel_resident(%arg0: i32, %arg1: memref<16x32xf32, #tpu.memory_space<vmem>>, %arg2: memref<32x256xf32, #tpu.memory_space<vmem>>, %arg3: memref<1x256xf32, #tpu.memory_space<vmem>>, %arg4: memref<256x32xf32, #tpu.memory_space<vmem>>, %arg5: memref<1x32xf32, #tpu.memory_space<vmem>>, %arg6: memref<16x32xf32, #tpu.memory_space<vmem>>) attributes {dimension_semantics = [#tpu.dimension_semantics<parallel>], iteration_bounds = array<i64: 2>, scalar_prefetch = 0 : i64, scratch_operands = 0 : i64, tpu.core_type = #tpu.core_type<tc>, window_params = [{transform_indices = @transform_0, window_bounds = array<i64: 16, 32>}, {pipeline_mode = #tpu.pipeline_mode<synchronous>, transform_indices = @transform_1, window_bounds = array<i64: 32, 256>}, {pipeline_mode = #tpu.pipeline_mode<synchronous>, transform_indices = @transform_2, window_bounds = array<i64: 1, 256>}, {pipeline_mode = #tpu.pipeline_mode<synchronous>, transform_indices = @transform_3, window_bounds = array<i64: 256, 32>}, {pipeline_mode = #tpu.pipeline_mode<synchronous>, transform_indices = @transform_4, window_bounds = array<i64: 1, 32>}, {transform_indices = @transform_5, window_bounds = array<i64: 16, 32>}]} {
    %c0 = arith.constant 0 : index
    %c0_0 = arith.constant 0 : index
    %0 = vector.load %arg1[%c0, %c0_0] : memref<16x32xf32, #tpu.memory_space<vmem>>, vector<16x32xf32>
    %c0_1 = arith.constant 0 : index
    %c0_2 = arith.constant 0 : index
    %1 = vector.load %arg2[%c0_1, %c0_2] : memref<32x256xf32, #tpu.memory_space<vmem>>, vector<32x256xf32>
    %cst = arith.constant dense<0.000000e+00> : vector<16x256xf32>
    %2 = tpu.matmul %0, %1, %cst {dimension_numbers = #tpu.dot_dimension_numbers<[1], [0], [0], [1], [0, 0, 1, 1], [], []>} : vector<16x32xf32>, vector<32x256xf32>, vector<16x256xf32> -> vector<16x256xf32>
    %c0_3 = arith.constant 0 : index
    %c0_4 = arith.constant 0 : index
    %3 = vector.load %arg3[%c0_3, %c0_4] : memref<1x256xf32, #tpu.memory_space<vmem>>, vector<1x256xf32>
    %4 = vector.broadcast %3 : vector<1x256xf32> to vector<16x256xf32>
    %5 = arith.addf %2, %4 : vector<16x256xf32>
    %cst_5 = arith.constant 5.000000e-01 : f32
    %6 = vector.broadcast %cst_5 : f32 to vector<16x256xf32>
    %7 = arith.mulf %6, %5 : vector<16x256xf32>
    %cst_6 = arith.constant 0.707106769 : f32
    %8 = vector.broadcast %cst_6 : f32 to vector<16x256xf32>
    %9 = arith.mulf %5, %8 : vector<16x256xf32>
    %10 = math.erf %9 : vector<16x256xf32>
    %cst_7 = arith.constant 1.000000e+00 : f32
    %11 = vector.broadcast %cst_7 : f32 to vector<16x256xf32>
    %12 = arith.addf %11, %10 : vector<16x256xf32>
    %13 = arith.mulf %7, %12 : vector<16x256xf32>
    %c0_8 = arith.constant 0 : index
    %c0_9 = arith.constant 0 : index
    %14 = vector.load %arg4[%c0_8, %c0_9] : memref<256x32xf32, #tpu.memory_space<vmem>>, vector<256x32xf32>
    %cst_10 = arith.constant dense<0.000000e+00> : vector<16x32xf32>
    %15 = tpu.matmul %13, %14, %cst_10 {dimension_numbers = #tpu.dot_dimension_numbers<[1], [0], [0], [1], [0, 0, 1, 1], [], []>} : vector<16x256xf32>, vector<256x32xf32>, vector<16x32xf32> -> vector<16x32xf32>
    %c0_11 = arith.constant 0 : index
    %c0_12 = arith.constant 0 : index
    %16 = vector.load %arg5[%c0_11, %c0_12] : memref<1x32xf32, #tpu.memory_space<vmem>>, vector<1x32xf32>
    %17 = vector.broadcast %16 : vector<1x32xf32> to vector<16x32xf32>
    %18 = arith.addf %15, %17 : vector<16x32xf32>
    %c0_13 = arith.constant 0 : index
    %c0_14 = arith.constant 0 : index
    %19 = vector.load %arg6[%c0_13, %c0_14] : memref<16x32xf32, #tpu.memory_space<vmem>>, vector<16x32xf32>
    tpu.vector_store %arg6[%c0_13, %c0_14], %18 {strides = array<i32>} : memref<16x32xf32, #tpu.memory_space<vmem>>, vector<16x32xf32>,
    return
  }
  func.func @transform_0(%arg0: i32) -> (i32, i32) {
    %c0_i32 = arith.constant 0 : i32
    %c0_i32_0 = arith.constant 0 : i32
    return %arg0, %c0_i32 : i32, i32
  }
  func.func @transform_1(%arg0: i32) -> (i32, i32) {
    %c0_i32 = arith.constant 0 : i32
    %c0_i32_0 = arith.constant 0 : i32
    %c0_i32_1 = arith.constant 0 : i32
    return %c0_i32, %c0_i32_0 : i32, i32
  }
  func.func @transform_2(%arg0: i32) -> (i32, i32) {
    %c0_i32 = arith.constant 0 : i32
    %c0_i32_0 = arith.constant 0 : i32
    %c0_i32_1 = arith.constant 0 : i32
    return %c0_i32, %c0_i32_0 : i32, i32
  }
  func.func @transform_3(%arg0: i32) -> (i32, i32) {
    %c0_i32 = arith.constant 0 : i32
    %c0_i32_0 = arith.constant 0 : i32
    %c0_i32_1 = arith.constant 0 : i32
    return %c0_i32, %c0_i32_0 : i32, i32
  }
  func.func @transform_4(%arg0: i32) -> (i32, i32) {
    %c0_i32 = arith.constant 0 : i32
    %c0_i32_0 = arith.constant 0 : i32
    %c0_i32_1 = arith.constant 0 : i32
    return %c0_i32, %c0_i32_0 : i32, i32
  }
  func.func @transform_5(%arg0: i32) -> (i32, i32) {
    %c0_i32 = arith.constant 0 : i32
    %c0_i32_0 = arith.constant 0 : i32
    return %arg0, %c0_i32 : i32, i32
  }
}

</mosaic_0001>

<llo_original>
// kernel: tpu_custom_call.1
$region0: #{tpu_custom_call.1}
  #allocation0 [shape = 'u32[]', space=smem, size = 0x4, offset = 0x4, fixed_abs, tag = 'smem constant byte address 0x4 - core index']
  #allocation1 [shape = 'u32[144,128]{1,0:T(1,128)}', space=vmem, size = 0x12000, scoped, tag = 'internal scratch']
  %s0 = inlined_call_operand.vmem [shape: f32[32,32], index: 0, kind: input, shape index: {}]
  %s1 = inlined_call_operand.vmem [shape: f32[32,256], index: 1, kind: input, shape index: {}]
  %s2 = inlined_call_operand.vmem [shape: f32[1,256], index: 2, kind: input, shape index: {}]
  %s3 = inlined_call_operand.vmem [shape: f32[256,32], index: 3, kind: input, shape index: {}]
  %s4 = inlined_call_operand.vmem [shape: f32[1,32], index: 4, kind: input, shape index: {}]
  %s5 = inlined_call_operand.hbm [shape: f32[32,32], index: 5, kind: output, shape index: {}]
  %s6 = sld [smem:[#allocation0]]
  $region53: #{tpu_custom_call.1} parent=0
    _
  %s8 = ssub.s32 1, %s6
  %s9 = scalar_select 0, %s8, %s6
  $region1: #{tpu_custom_call.1} parent=0
    #allocation2 [shape = 'u8[16384]{0}', space=vmem, size = 0x4000, scoped, tag = 'output window, operand 0']
    #allocation3 [shape = 's32[2]{0}', space=sflag, size = 0x8, scoped, tag = 'scoped memory for tpu_custom_call.1']
    %10 = vsyncpa [#allocation3], 0
    %s11 = scalar_lea.sflag [#allocation3], 1
    %12 = vsyncpa %s11, 0
    loop: start=0, step=1, limit=4
    $region2: #{tpu_custom_call.1} parent=1 // loop_pre_header
      _
    $region3: #{tpu_custom_call.1} parent=1 // loop_header
      %s14 = sphi 0, %s18
      %p15 = scmp.ge.s32.totalorder %s14, 4
      %s24 = sphi 0, %s26
      %s27 = sphi 0, %s24
      %s28 = sphi 0, %s27
      %s44 = sphi 0, %s28
      %s48 = sphi 0, %s48
      %s50 = sphi 0, %s48
      %s51 = sphi 0, %s50
      %s65 = sphi 0, %s51
      %s69 = sphi 0, %s69
      %s71 = sphi 0, %s69
      %s72 = sphi 0, %s71
      %s86 = sphi 0, %s72
      %s90 = sphi 0, %s90
      %s92 = sphi 0, %s90
      %s93 = sphi 0, %s92
      %s107 = sphi 0, %s93
      %s111 = sphi 0, %s111
      %s113 = sphi 0, %s111
      %s114 = sphi 0, %s113
      %s128 = sphi 0, %s114
      %s134 = sphi 0, %s136
      %s137 = sphi 0, %s134
      %s138 = sphi 0, %s137
      %s154 = sphi 0, %s138
    $region4: #{tpu_custom_call.1} parent=1 // loop_header_branch
      %17 = sbr.rel (%p15) target = $region8
    $region5: #{tpu_custom_call.1} parent=1 // loop_body
      %s19 = ssub.s32 %s14, 1
      %s20 = ssub.s32 %s14, 2
      %s21 = sadd.s32 %s14, 1
      %s22 = ssub.s32 %s14, %s21
      %p23 = scmp.eq.s32.totalorder %s22, 0
      %s25 = sadd.s32 %s24, 1
      %s26 = scalar_select %p23, %s24, %s25
      %p29 = pneg %p23
      %p30 = scmp.eq.s32.totalorder %s14, 1
      %p31 = por %p29, %p30
      %p32 = scmp.ne.s32.totalorder %s24, %s27
      %p33 = scmp.eq.s32.totalorder %s14, 0
      %p34 = por %p32, %p33
      %p35 = scmp.ne.s32.totalorder %s24, %s27
      %p36 = scmp.eq.s32.totalorder %s19, 1
      %p37 = por %p35, %p36
      %p38 = scmp.ne.s32.totalorder %s27, %s28
      %p39 = scmp.eq.s32.totalorder %s19, 0
      %p40 = por %p38, %p39
      %p41 = scmp.ne.s32.totalorder %s27, %s28
      %p42 = scmp.eq.s32.totalorder %s20, 1
      %p43 = por %p41, %p42
      %p45 = scmp.ne.s32.totalorder %s28, %s44
      %p46 = scmp.eq.s32.totalorder %s20, 0
      %p47 = por %p45, %p46
      %s49 = sadd.s32 %s48, 1
      %p52 = scmp.eq.s32.totalorder %s14, 1
      %p53 = scmp.ne.s32.totalorder %s48, %s50
      %p54 = scmp.eq.s32.totalorder %s14, 0
      %p55 = por %p53, %p54
      %p56 = scmp.ne.s32.totalorder %s48, %s50
      %p57 = scmp.eq.s32.totalorder %s19, 1
      %p58 = por %p56, %p57
      %p59 = scmp.ne.s32.totalorder %s50, %s51
      %p60 = scmp.eq.s32.totalorder %s19, 0
      %p61 = por %p59, %p60
      %p62 = scmp.ne.s32.totalorder %s50, %s51
      %p63 = scmp.eq.s32.totalorder %s20, 1
      %p64 = por %p62, %p63
      %p66 = scmp.ne.s32.totalorder %s51, %s65
      %p67 = scmp.eq.s32.totalorder %s20, 0
      %p68 = por %p66, %p67
      %s70 = sadd.s32 %s69, 1
      %p73 = scmp.eq.s32.totalorder %s14, 1
      %p74 = scmp.ne.s32.totalorder %s69, %s71
      %p75 = scmp.eq.s32.totalorder %s14, 0
      %p76 = por %p74, %p75
      %p77 = scmp.ne.s32.totalorder %s69, %s71
      %p78 = scmp.eq.s32.totalorder %s19, 1
      %p79 = por %p77, %p78
      %p80 = scmp.ne.s32.totalorder %s71, %s72
      %p81 = scmp.eq.s32.totalorder %s19, 0
      %p82 = por %p80, %p81
      %p83 = scmp.ne.s32.totalorder %s71, %s72
      %p84 = scmp.eq.s32.totalorder %s20, 1
      %p85 = por %p83, %p84
      %p87 = scmp.ne.s32.totalorder %s72, %s86
      %p88 = scmp.eq.s32.totalorder %s20, 0
      %p89 = por %p87, %p88
      %s91 = sadd.s32 %s90, 1
      %p94 = scmp.eq.s32.totalorder %s14, 1
      %p95 = scmp.ne.s32.totalorder %s90, %s92
      %p96 = scmp.eq.s32.totalorder %s14, 0
      %p97 = por %p95, %p96
      %p98 = scmp.ne.s32.totalorder %s90, %s92
      %p99 = scmp.eq.s32.totalorder %s19, 1
      %p100 = por %p98, %p99
      %p101 = scmp.ne.s32.totalorder %s92, %s93
      %p102 = scmp.eq.s32.totalorder %s19, 0
      %p103 = por %p101, %p102
      %p104 = scmp.ne.s32.totalorder %s92, %s93
      %p105 = scmp.eq.s32.totalorder %s20, 1
      %p106 = por %p104, %p105
      %p108 = scmp.ne.s32.totalorder %s93, %s107
      %p109 = scmp.eq.s32.totalorder %s20, 0
      %p110 = por %p108, %p109
      %s112 = sadd.s32 %s111, 1
      %p115 = scmp.eq.s32.totalorder %s14, 1
      %p116 = scmp.ne.s32.totalorder %s111, %s113
      %p117 = scmp.eq.s32.totalorder %s14, 0
      %p118 = por %p116, %p117
      %p119 = scmp.ne.s32.totalorder %s111, %s113
      %p120 = scmp.eq.s32.totalorder %s19, 1
      %p121 = por %p119, %p120
      %p122 = scmp.ne.s32.totalorder %s113, %s114
      %p123 = scmp.eq.s32.totalorder %s19, 0
      %p124 = por %p122, %p123
      %p125 = scmp.ne.s32.totalorder %s113, %s114
      %p126 = scmp.eq.s32.totalorder %s20, 1
      %p127 = por %p125, %p126
      %p129 = scmp.ne.s32.totalorder %s114, %s128
      %p130 = scmp.eq.s32.totalorder %s20, 0
      %p131 = por %p129, %p130
      %s132 = ssub.s32 %s14, %s21
      %p133 = scmp.eq.s32.totalorder %s132, 0
      %s135 = sadd.s32 %s134, 1
      %s136 = scalar_select %p133, %s134, %s135
      %p139 = pneg %p133
      %p140 = scmp.eq.s32.totalorder %s14, 1
      %p141 = por %p139, %p140
      %p142 = scmp.ne.s32.totalorder %s134, %s137
      %p143 = scmp.eq.s32.totalorder %s14, 0
      %p144 = por %p142, %p143
      %p145 = scmp.ne.s32.totalorder %s134, %s137
      %p146 = scmp.eq.s32.totalorder %s19, 1
      %p147 = por %p145, %p146
      %p148 = scmp.ne.s32.totalorder %s137, %s138
      %p149 = scmp.eq.s32.totalorder %s19, 0
      %p150 = por %p148, %p149
      %p151 = scmp.ne.s32.totalorder %s137, %s138
      %p152 = scmp.eq.s32.totalorder %s20, 1
      %p153 = por %p151, %p152
      %p155 = scmp.ne.s32.totalorder %s138, %s154
      %p156 = scmp.eq.s32.totalorder %s20, 0
      %p157 = por %p155, %p156
      %p158 = scmp.le.s32.totalorder 1, %s14
      %p159 = scmp.lt.s32.totalorder %s14, 3
      %p160 = pnand %p158, %p159
      %p161 = pneg %p160
      // Predicated region
      $region9: #{tpu_custom_call.1} parent=5 // pred_check
        _
      $region10: #{tpu_custom_call.1} parent=5 // pred_check_branch
        %163 = sbr.rel (%p160) target = $region12
      $region11: #{tpu_custom_call.1} parent=5 // pred_region
        %s164 = ssub.s32 %s14, 1
        // Predicated region
        $region13: #{tpu_custom_call.1} parent=11 // pred_check
          %p165 = pneg %p61
        $region14: #{tpu_custom_call.1} parent=11 // pred_check_branch
          %167 = sbr.rel (%p165) target = $region16
        $region15: #{tpu_custom_call.1} parent=11 // pred_region
          _
        $region16: #{tpu_custom_call.1} parent=11 // pred_fallthru
          _
        // Predicated region
        $region17: #{tpu_custom_call.1} parent=11 // pred_check
          %p168 = pneg %p82
        $region18: #{tpu_custom_call.1} parent=11 // pred_check_branch
          %170 = sbr.rel (%p168) target = $region20
        $region19: #{tpu_custom_call.1} parent=11 // pred_region
          _
        $region20: #{tpu_custom_call.1} parent=11 // pred_fallthru
          _
        // Predicated region
        $region21: #{tpu_custom_call.1} parent=11 // pred_check
          %p171 = pneg %p103
        $region22: #{tpu_custom_call.1} parent=11 // pred_check_branch
          %173 = sbr.rel (%p171) target = $region24
        $region23: #{tpu_custom_call.1} parent=11 // pred_region
          _
        $region24: #{tpu_custom_call.1} parent=11 // pred_fallthru
          _
        // Predicated region
        $region25: #{tpu_custom_call.1} parent=11 // pred_check
          %p174 = pneg %p124
        $region26: #{tpu_custom_call.1} parent=11 // pred_check_branch
          %176 = sbr.rel (%p174) target = $region28
        $region27: #{tpu_custom_call.1} parent=11 // pred_region
          _
        $region28: #{tpu_custom_call.1} parent=11 // pred_fallthru
          _
      $region12: #{tpu_custom_call.1} parent=5 // pred_fallthru
        _
      %p177 = scmp.lt.s32.totalorder %s14, 2
      // Predicated region
      $region29: #{tpu_custom_call.1} parent=5 // pred_check
        %p178 = pneg %p177
      $region30: #{tpu_custom_call.1} parent=5 // pred_check_branch
        %180 = sbr.rel (%p178) target = $region32
      $region31: #{tpu_custom_call.1} parent=5 // pred_region
        // Predicated region
        $region33: #{tpu_custom_call.1} parent=31 // pred_check
          %p181 = pneg %p34
        $region34: #{tpu_custom_call.1} parent=31 // pred_check_branch
          %183 = sbr.rel (%p181) target = $region36
        $region35: #{tpu_custom_call.1} parent=31 // pred_region
          %s184 = smul.u32 2, %s14
          %p185 = scmp.lt.s32.totalorder %s184, 3
          %s186 = scalar_select %p185, %s184, 3
          %s187 = smul.addr %s186, 8
          %s188 = scalar_lea.vmem %s0, %s187
          %s189 = smul.u32 2, %s14
        $region36: #{tpu_custom_call.1} parent=31 // pred_fallthru
          _
      $region32: #{tpu_custom_call.1} parent=5 // pred_fallthru
        _
      %p190 = scmp.le.s32.totalorder 1, %s14
      %p191 = scmp.lt.s32.totalorder %s14, 3
      %p192 = pnand %p190, %p191
      %p193 = pneg %p192
      // Predicated region
      $region37: #{tpu_custom_call.1} parent=5 // pred_check
        _
      $region38: #{tpu_custom_call.1} parent=5 // pred_check_branch
        %195 = sbr.rel (%p192) target = $region40
      $region39: #{tpu_custom_call.1} parent=5 // pred_region
        %s196 = ssub.s32 %s14, 1
        %s197 = smul.u32 2, %s19
        %p198 = scmp.lt.s32.totalorder %s197, 3
        %s199 = scalar_select %p198, %s197, 3
        %s200 = smul.addr %s199, 8
        %s201 = scalar_lea.vmem %s0, %s200
        %p202 = pneg %p40
        %p203 = pneg %p37
        %p204 = pneg %p61
        %p205 = pneg %p58
        %p206 = pneg %p82
        %p207 = pneg %p79
        %p208 = pneg %p103
        %p209 = pneg %p100
        %p210 = pneg %p124
        %p211 = pneg %p121
        %p212 = pneg %p150
        %p213 = pneg %p147
        %s214 = sand.u32 %s137, 1
        %s215 = scalar_lea.sflag [#allocation3], %s214
        %s216 = sand.u32 %s137, 1
        %s217 = smul.addr %s216, 16
        %s218 = scalar_lea.vmem [#allocation2], %s217
        %s219 = smul.u32 2, %s19
        %p220 = scmp.lt.s32.totalorder %s219, 3
        %s221 = scalar_select %p220, %s219, 3
        %s222 = smul.addr %s221, 8
        %s223 = scalar_lea.vmem %s0, %s222
        %s224 = smul.u32 2, %s19
        %s225 = smul.u32 2, %s19
        %v226 = vld [vmem:[%s223] sm:$0xff]
        %v227 = vld [vmem:[%s223 + $0x8] sm:$0xff]
        %v228 = vld [vmem:[%s1] sm:$0xff]
        %v229 = vld [vmem:[%s1 + $0x8] sm:$0xff]
        %v230 = vld [vmem:[%s1 + $0x10] sm:$0xff]
        %v231 = vld [vmem:[%s1 + $0x18] sm:$0xff]
        %v232 = vld [vmem:[%s1 + $0x20] sm:$0xff]
        %v233 = vld [vmem:[%s1 + $0x28] sm:$0xff]
        %v234 = vld [vmem:[%s1 + $0x30] sm:$0xff]
        %v235 = vld [vmem:[%s1 + $0x38] sm:$0xff]
        %v236 = vld [vmem:[%s2] sm:$0x3]
        %v238 = vlaneseq
        %v239 = vshrl.u32 %v238, 7
        %v240 = vsub.s32 0, %v239
        %v241 = vrot.slane %v236, %v240
        %v242 = vlaneseq
        %v243 = vshrl.u32 %v242, 7
        %v244 = vsub.s32 1, %v243
        %v245 = vrot.slane %v236, %v244
        %vm248 = vcmask 261120
        %v250 = vsel %vm248, %v226, 0
        %v253 = vsel %vm248, %v227, 0
        %255 = vmatprep.subr.mxu0 %v229
        %256 = vmatpush1.msra.mxu0 %v228
        %257 = vmatprep.subr.mxu0 %v231
        %258 = vmatpush1.msra.mxu0 %v230
        %259 = vmatprep.subr.mxu0 %v233
        %260 = vmatpush1.msra.mxu0 %v232
        %261 = vmatprep.subr.mxu0 %v235
        %262 = vmatpush1.msra.mxu0 %v234
        %263 = vmatprep.subr.mxu0 0.0
        %264 = vmatpush1.msra.mxu0 0.0
        %265 = vmatprep.subr.mxu0 0.0
        %266 = vmatpush1.msra.mxu0 0.0
        %267 = vmatprep.subr.mxu0 0.0
        %268 = vmatpush1.msra.mxu0 0.0
        %269 = vmatprep.subr.mxu0 0.0
        %270 = vmatpush1.msra.mxu0 0.0
        %271 = vmatprep.subr.mxu0 0.0
        %272 = vmatpush1.msra.mxu0 0.0
        %273 = vmatprep.subr.mxu0 0.0
        %274 = vmatpush1.msra.mxu0 0.0
        %275 = vmatprep.subr.mxu0 0.0
        %276 = vmatpush1.msra.mxu0 0.0
        %277 = vmatprep.subr.mxu0 0.0
        %278 = vmatpush1.msra.mxu0 0.0
        %279 = vmatprep.subr.mxu0 0.0
        %280 = vmatpush1.msra.mxu0 0.0
        %281 = vmatprep.subr.mxu0 0.0
        %282 = vmatpush1.msra.mxu0 0.0
        %283 = vmatprep.subr.mxu0 0.0
        %284 = vmatpush1.msra.mxu0 0.0
        %285 = vmatprep.subr.mxu0 0.0
        %286 = vmatpush1.msra.mxu0 0.0
        %287 = vmatprep.subr.mxu0 0.0
        %288 = vmatpush1.msra.mxu0 0.0
        %289 = vmatprep.subr.mxu0 0.0
        %290 = vmatpush1.msra.mxu0 0.0
        %291 = vmatprep.subr.mxu0 0.0
        %292 = vmatpush1.msra.mxu0 0.0
        %293 = vmatprep.subr.mxu0 0.0
        %294 = vmatpush1.msra.mxu0 0.0
        %295 = vmatprep.subr.mxu0 0.0
        %296 = vmatpush1.msra.mxu0 0.0
        %297 = vmatprep.subr.mxu0 0.0
        %298 = vmatpush1.msra.mxu0 0.0
        %299 = vmatprep.subr.mxu0 0.0
        %300 = vmatpush1.msra.mxu0 0.0
        %301 = vmatprep.subr.mxu0 0.0
        %302 = vmatpush1.msra.mxu0 0.0
        %303 = vmatprep.subr.mxu0 0.0
        %304 = vmatpush1.msra.mxu0 0.0
        %305 = vmatprep.subr.mxu0 0.0
        %306 = vmatpush1.msra.mxu0 0.0
        %307 = vmatprep.subr.mxu0 0.0
        %308 = vmatpush1.msra.mxu0 0.0
        %309 = vmatprep.subr.mxu0 0.0
        %310 = vmatpush1.msra.mxu0 0.0
        %311 = vmatprep.subr.mxu0 0.0
        %312 = vmatpush1.msra.mxu0 0.0
        %313 = vmatprep.subr.mxu0 0.0
        %314 = vmatpush1.msra.mxu0 0.0
        %315 = vmatprep.subr.mxu0 0.0
        %316 = vmatpush1.msra.mxu0 0.0
        %317 = vmatprep.subr.mxu0 0.0
        %318 = vmatpush1.msra.mxu0 0.0
        %319 = vmatprep.mubr.f32.mxu0 0.0
        %320 = vmatmul.mubr.f32.gmra.mrb[0].mxu0 %v250
        %v321 = vpop.f32.mrb[0].mxu0
        %v322 = vadd.f32 %v241, %v321
        %v323 = vpop.f32.mrb[0].mxu0
        %v324 = vadd.f32 %v245, %v323
        %325 = vmatprep.mubr.f32.mxu0 0.0
        %326 = vmatmul.mubr.f32.gmra.mrb[0].mxu0 %v253
        %v327 = vpop.f32.mrb[0].mxu0
        %v328 = vadd.f32 %v241, %v327
        %v329 = vpop.f32.mrb[0].mxu0
        %v330 = vadd.f32 %v245, %v329
        %331 = vdwg.mxu0
        %v332 = vmul.f32 %v322, 0.5
        %v333 = vmul.f32 %v324, 0.5
        %v334 = vmul.f32 %v328, 0.5
        %v335 = vmul.f32 %v330, 0.5
        %v336 = vmul.f32 %v322, 0.70710677
        %v337 = vmul.f32 %v324, 0.70710677
        %v338 = vmul.f32 %v328, 0.70710677
        %v339 = vmul.f32 %v330, 0.70710677
        %v340 = verf.f32.pop %v336
        %v341 = verf.f32.pop %v337
        %v342 = verf.f32.pop %v338
        %v343 = verf.f32.pop %v339
        %v344 = vadd.f32 %v340, 1.0
        %v345 = vadd.f32 %v341, 1.0
        %v346 = vadd.f32 %v342, 1.0
        %v347 = vadd.f32 %v343, 1.0
        %v348 = vmul.f32 %v332, %v344
        %v349 = vmul.f32 %v333, %v345
        %v350 = vmul.f32 %v334, %v346
        %v351 = vmul.f32 %v335, %v347
        %v352 = vld [vmem:[%s3] sm:$0xff]
        %v353 = vld [vmem:[%s3 + $0x8] sm:$0xff]
        %v354 = vld [vmem:[%s3 + $0x10] sm:$0xff]
        %v355 = vld [vmem:[%s3 + $0x18] sm:$0xff]
        %v356 = vld [vmem:[%s3 + $0x20] sm:$0xff]
        %v357 = vld [vmem:[%s3 + $0x28] sm:$0xff]
        %v358 = vld [vmem:[%s3 + $0x30] sm:$0xff]
        %v359 = vld [vmem:[%s3 + $0x38] sm:$0xff]
        %v360 = vld [vmem:[%s3 + $0x40] sm:$0xff]
        %v361 = vld [vmem:[%s3 + $0x48] sm:$0xff]
        %v362 = vld [vmem:[%s3 + $0x50] sm:$0xff]
        %v363 = vld [vmem:[%s3 + $0x58] sm:$0xff]
        %v364 = vld [vmem:[%s3 + $0x60] sm:$0xff]
        %v365 = vld [vmem:[%s3 + $0x68] sm:$0xff]
        %v366 = vld [vmem:[%s3 + $0x70] sm:$0xff]
        %v367 = vld [vmem:[%s3 + $0x78] sm:$0xff]
        %v368 = vld [vmem:[%s3 + $0x80] sm:$0xff]
        %v369 = vld [vmem:[%s3 + $0x88] sm:$0xff]
        %v370 = vld [vmem:[%s3 + $0x90] sm:$0xff]
        %v371 = vld [vmem:[%s3 + $0x98] sm:$0xff]
        %v372 = vld [vmem:[%s3 + $0xa0] sm:$0xff]
        %v373 = vld [vmem:[%s3 + $0xa8] sm:$0xff]
        %v374 = vld [vmem:[%s3 + $0xb0] sm:$0xff]
        %v375 = vld [vmem:[%s3 + $0xb8] sm:$0xff]
        %v376 = vld [vmem:[%s3 + $0xc0] sm:$0xff]
        %v377 = vld [vmem:[%s3 + $0xc8] sm:$0xff]
        %v378 = vld [vmem:[%s3 + $0xd0] sm:$0xff]
        %v379 = vld [vmem:[%s3 + $0xd8] sm:$0xff]
        %v380 = vld [vmem:[%s3 + $0xe0] sm:$0xff]
        %v381 = vld [vmem:[%s3 + $0xe8] sm:$0xff]
        %v382 = vld [vmem:[%s3 + $0xf0] sm:$0xff]
        %v383 = vld [vmem:[%s3 + $0xf8] sm:$0xff]
        %v384 = vld [vmem:[%s4] sm:$0x1]
        %v386 = vlaneseq
        %v387 = vshrl.u32 %v386, 7
        %v388 = vsub.s32 0, %v387
        %v389 = vrot.slane %v384, %v388
        %391 = vmatprep.subr.mxu0 0.0
        %392 = vmatpush1.msra.mxu0 %v352
        %393 = vmatprep.subr.mxu0 0.0
        %394 = vmatpush1.msra.mxu0 %v353
        %395 = vmatprep.subr.mxu0 0.0
        %396 = vmatpush1.msra.mxu0 %v354
        %397 = vmatprep.subr.mxu0 0.0
        %398 = vmatpush1.msra.mxu0 %v355
        %399 = vmatprep.subr.mxu0 0.0
        %400 = vmatpush1.msra.mxu0 %v356
        %401 = vmatprep.subr.mxu0 0.0
        %402 = vmatpush1.msra.mxu0 %v357
        %403 = vmatprep.subr.mxu0 0.0
        %404 = vmatpush1.msra.mxu0 %v358
        %405 = vmatprep.subr.mxu0 0.0
        %406 = vmatpush1.msra.mxu0 %v359
        %407 = vmatprep.subr.mxu0 0.0
        %408 = vmatpush1.msra.mxu0 %v360
        %409 = vmatprep.subr.mxu0 0.0
        %410 = vmatpush1.msra.mxu0 %v361
        %411 = vmatprep.subr.mxu0 0.0
        %412 = vmatpush1.msra.mxu0 %v362
        %413 = vmatprep.subr.mxu0 0.0
        %414 = vmatpush1.msra.mxu0 %v363
        %415 = vmatprep.subr.mxu0 0.0
        %416 = vmatpush1.msra.mxu0 %v364
        %417 = vmatprep.subr.mxu0 0.0
        %418 = vmatpush1.msra.mxu0 %v365
        %419 = vmatprep.subr.mxu0 0.0
        %420 = vmatpush1.msra.mxu0 %v366
        %421 = vmatprep.subr.mxu0 0.0
        %422 = vmatpush1.msra.mxu0 %v367
        %423 = vmatprep.subr.mxu0 0.0
        %424 = vmatpush1.msra.mxu0 %v368
        %425 = vmatprep.subr.mxu0 0.0
        %426 = vmatpush1.msra.mxu0 %v369
        %427 = vmatprep.subr.mxu0 0.0
        %428 = vmatpush1.msra.mxu0 %v370
        %429 = vmatprep.subr.mxu0 0.0
        %430 = vmatpush1.msra.mxu0 %v371
        %431 = vmatprep.subr.mxu0 0.0
        %432 = vmatpush1.msra.mxu0 %v372
        %433 = vmatprep.subr.mxu0 0.0
        %434 = vmatpush1.msra.mxu0 %v373
        %435 = vmatprep.subr.mxu0 0.0
        %436 = vmatpush1.msra.mxu0 %v374
        %437 = vmatprep.subr.mxu0 0.0
        %438 = vmatpush1.msra.mxu0 %v375
        %439 = vmatprep.subr.mxu0 0.0
        %440 = vmatpush1.msra.mxu0 %v376
        %441 = vmatprep.subr.mxu0 0.0
        %442 = vmatpush1.msra.mxu0 %v377
        %443 = vmatprep.subr.mxu0 0.0
        %444 = vmatpush1.msra.mxu0 %v378
        %445 = vmatprep.subr.mxu0 0.0
        %446 = vmatpush1.msra.mxu0 %v379
        %447 = vmatprep.subr.mxu0 0.0
        %448 = vmatpush1.msra.mxu0 %v380
        %449 = vmatprep.subr.mxu0 0.0
        %450 = vmatpush1.msra.mxu0 %v381
        %451 = vmatprep.subr.mxu0 0.0
        %452 = vmatpush1.msra.mxu0 %v382
        %453 = vmatprep.subr.mxu0 0.0
        %454 = vmatpush1.msra.mxu0 %v383
        %455 = vmatprep.mubr.f32.mxu0 %v349
        %456 = vmatmul.mubr.f32.gmra.mrb[0].mxu0 %v348
        %v457 = vpop.f32.mrb[0].mxu0
        %v458 = vadd.f32 %v389, %v457
        %v459 = vpop.f32.mrb[0].mxu0
        %460 = vmatprep.mubr.f32.mxu0 %v351
        %461 = vmatmul.mubr.f32.gmra.mrb[0].mxu0 %v350
        %v462 = vpop.f32.mrb[0].mxu0
        %v463 = vadd.f32 %v389, %v462
        %v464 = vpop.f32.mrb[0].mxu0
        %465 = vdwg.mxu0
        %466 = vst.msk [vmem:[%s218] sm:$0xff] %vm248, %v458
        %467 = vst.msk [vmem:[%s218 + $0x8] sm:$0xff] %vm248, %v463
        %s468 = sand.u32 %s137, 1
        %s469 = scalar_lea.sflag [#allocation3], %s468
        %s470 = sand.u32 %s137, 1
        %s471 = smul.addr %s470, 16
        %s472 = scalar_lea.vmem [#allocation2], %s471
        // Predicated region
        $region41: #{tpu_custom_call.1} parent=39 // pred_check
          %p473 = pneg %p147
        $region42: #{tpu_custom_call.1} parent=39 // pred_check_branch
          %475 = sbr.rel (%p473) target = $region44
        $region43: #{tpu_custom_call.1} parent=39 // pred_region
          %s476 = smul.u32 2, %s19
          %s478 = ssub.s32 256, 256
          %479 = vsyncadd %s469, %s478
          %s480 = smul.addr %s476, 128
          %s481 = scalar_lea.hbm %s5, %s480
          %s482 = sshll.u32 %s472, 4
          %s483 = int_to_ptr.vmem [resolvable:$true] %s482
          %488 = dma.vmem_to_hbm [thread:$0]  %s483, 256, %s481, %s469, 128, 128, 8
        $region44: #{tpu_custom_call.1} parent=39 // pred_fallthru
          _
      $region40: #{tpu_custom_call.1} parent=5 // pred_fallthru
        _
      %p489 = scmp.le.s32.totalorder 2, %s14
      // Predicated region
      $region45: #{tpu_custom_call.1} parent=5 // pred_check
        %p490 = pneg %p489
      $region46: #{tpu_custom_call.1} parent=5 // pred_check_branch
        %492 = sbr.rel (%p490) target = $region48
      $region47: #{tpu_custom_call.1} parent=5 // pred_region
        %s493 = ssub.s32 %s14, 2
        // Predicated region
        $region49: #{tpu_custom_call.1} parent=47 // pred_check
          %p494 = pneg %p153
        $region50: #{tpu_custom_call.1} parent=47 // pred_check_branch
          %496 = sbr.rel (%p494) target = $region52
        $region51: #{tpu_custom_call.1} parent=47 // pred_region
          %s497 = sand.u32 %s138, 1
          %s498 = scalar_lea.sflag [#allocation3], %s497
          %s499 = sand.u32 %s138, 1
          %s500 = smul.addr %s499, 16
          %s501 = scalar_lea.vmem [#allocation2], %s500
          %502 = dma.done %s498, 256
        $region52: #{tpu_custom_call.1} parent=47 // pred_fallthru
          _
      $region48: #{tpu_custom_call.1} parent=5 // pred_fallthru
        _
    $region6: #{tpu_custom_call.1} parent=1 // loop_footer
      %s18 = sadd.s32 1, %s14
    $region7: #{tpu_custom_call.1} parent=1 // loop_footer_branch
      %13 = sbr.rel target = $region3
    $region8: #{tpu_custom_call.1} parent=1 // loop_exit
      _
    %503 = vsyncpa [#allocation3], 1
    %s504 = scalar_lea.sflag [#allocation3], 1
    %505 = vsyncpa %s504, 1

</llo_original>
